<compile_context>
chip_gen: v6e
topology: v6e:2x2x1
jax: 0.10.0
libtpu: 0.0.40
codegen_flags: <defaults>
</compile_context>

<pallas_src>
import jax
import jax.numpy as jnp
from jax.experimental import pallas as pl
from jax.experimental.pallas import tpu as pltpu


def _round_up(n, m):
    return ((n + m - 1) // m) * m


def _auto_use_bf16():
    """bf16 compute is a win on v6e/v7x (bf16 EUP/VPU/MXU); not on v5e/v4."""
    try:
        d = jax.devices()[0]
        if d.platform != "tpu":
            return False
        kind = d.device_kind.lower()
        return ("v6" in kind) or ("v7" in kind) or ("7x" in kind)
    except Exception:
        return False


def _make_kernel(use_bf16: bool):
    cdt = jnp.bfloat16 if use_bf16 else jnp.float32
    prec = None if use_bf16 else jax.lax.Precision.HIGHEST

    def mlp_kernel(x_ref, packed_ref, w2_ref, w3_ref, b3_ref, o_ref):
        # Shapes (batch on lanes):
        #   x_ref      : [2,  TB]  (columns = samples)
        #   packed_ref : [32, 4]   columns = [W1 col0 | W1 col1 | b1 | b2]
        #   w2_ref     : [32, 32]  (W2^T)            in cdt
        #   w3_ref     : [1,  32]  (W3 row)          in cdt
        #   b3_ref     : [1, 1] scalar in SMEM (f32)
        #   o_ref      : [1,  TB]
        x = x_ref[...]                       # [2, TB] f32
        packed = packed_ref[...]             # [32, 4] f32
        w1c0 = packed[:, 0:1]
        w1c1 = packed[:, 1:2]
        b1 = packed[:, 2:3]
        b2 = packed[:, 3:4]

        # Layer 1: Linear(2, 32) + Tanh.  K=2 -> stays on VPU (two FMAs);
        # tanh on the EUP (bf16 on v6e/v7x for ~2x EUP throughput).
        pre1 = w1c0 * x[0:1, :] + w1c1 * x[1:2, :] + b1        # [32, TB] f32
        h1 = jnp.tanh(pre1.astype(cdt))                        # [32, TB] cdt

        # Layer 2: Linear(32, 32) + Tanh.  The only MXU-worthy matmul.
        pre2 = jnp.dot(w2_ref[...], h1,
                       preferred_element_type=jnp.float32,
                       precision=prec) + b2                    # [32, TB] f32
        h2 = jnp.tanh(pre2.astype(cdt))                        # [32, TB] cdt

        # Layer 3: Linear(32, 1) as a [1,32]x[32,TB] matmul on the (otherwise
        # idle) MXU, freeing VPU/XLU cycles; bias read as a scalar from SMEM.
        out = jnp.dot(w3_ref[...], h2,
                      preferred_element_type=jnp.float32,
                      precision=prec) + b3_ref[0, 0]           # [1, TB] f32

        o_ref[...] = out.astype(o_ref.dtype)

    return mlp_kernel


def mlp_forward(x, params, *, max_tile_b=8192, use_bf16=None):
    """x: [N, 2] float32; params from init_params. Returns [N, 1] float32."""
    if use_bf16 is None:
        use_bf16 = _auto_use_bf16()
    cdt = jnp.bfloat16 if use_bf16 else jnp.float32

    w1, b1, w2, b2, w3, b3 = params
    n = x.shape[0]

    # --- batch tiling -------------------------------------------------------
    # Lane tile: multiple of 128, large enough to amortize per-step overhead.
    max_tile_b = max(128, (max_tile_b // 128) * 128)   # defensive 128 rounding
    n128 = _round_up(n, 128)
    tile_b = min(max_tile_b, n128)
    # Keep >= 2 grid tiles when the batch permits so both v7x TensorCores get
    # work (harmless on single-TC v5e/v6e).
    if tile_b == n128 and n128 >= 2 * 128:
        tile_b = _round_up(n128 // 2, 128)
    n_pad = _round_up(n, tile_b)
    num_tiles = n_pad // tile_b

    # --- operand layout -----------------------------------------------------
    # Lane-dense transposed input (batch -> lanes); zero-pad the batch.
    xt = jnp.zeros((2, n_pad), jnp.float32).at[:, :n].set(x.T)
    # Pack the tiny resident operands into one [32, 4] buffer.
    packed = jnp.concatenate([w1.T, b1.T, b2.T], axis=1)       # [32, 4] f32
    w2t = w2.T.astype(cdt)                                     # [32, 32]
    w3r = w3.T.astype(cdt)                                     # [1, 32]
    b3s = b3.astype(jnp.float32)                               # [1, 1] -> SMEM

    cost = pl.CostEstimate(
        flops=2 * n_pad * (2 * 32 + 32 * 32 + 32),
        transcendentals=64 * n_pad,
        bytes_accessed=4 * (n_pad * (2 + 1)) + 4 * (32 * 4 + 1)
        + (2 if use_bf16 else 4) * (32 * 32 + 32),
    )

    def resident(a):
        # Whole array, same block every grid step (fetched once, stays in VMEM).
        return pl.BlockSpec(a.shape, lambda i: (0,) * a.ndim)

    out_t = pl.pallas_call(
        _make_kernel(use_bf16),
        out_shape=jax.ShapeDtypeStruct((1, n_pad), jnp.float32),
        grid=(num_tiles,),
        in_specs=[
            pl.BlockSpec((2, tile_b), lambda i: (0, i)),        # x^T, batch-tiled
            resident(packed),
            resident(w2t),
            resident(w3r),
            pl.BlockSpec(memory_space=pltpu.MemorySpace.SMEM),  # b3 scalar
        ],
        out_specs=pl.BlockSpec((1, tile_b), lambda i: (0, i)),
        compiler_params=pltpu.CompilerParams(
            dimension_semantics=("parallel",),
        ),
        cost_estimate=cost,
    )(xt, packed, w2t, w3r, b3s)

    return out_t[:, :n].T  # [N, 1]


def init_params(key):
    """Deterministic init mirroring torch.nn.Linear default (U[-1/sqrt(fan_in), 1/sqrt(fan_in)])."""
    def linear(key, fan_in, fan_out):
        kw, kb = jax.random.split(key)
        bound = 1.0 / jnp.sqrt(fan_in)
        w = jax.random.uniform(kw, (fan_in, fan_out), jnp.float32, -bound, bound)
        b = jax.random.uniform(kb, (1, fan_out), jnp.float32, -bound, bound)
        return w, b

    k1, k2, k3 = jax.random.split(key, 3)
    w1, b1 = linear(k1, 2, 32)
    w2, b2 = linear(k2, 32, 32)
    w3, b3 = linear(k3, 32, 1)
    return w1, b1, w2, b2, w3, b3


if __name__ == "__main__":
    key = jax.random.PRNGKey(0)
    k_params, k_x = jax.random.split(key)

    params = init_params(k_params)
    x = jax.random.normal(k_x, (8, 2), jnp.float32)  # batch=8, in_features=2

    use_bf16 = _auto_use_bf16()
    out = mlp_forward(x, params, use_bf16=use_bf16)
    out = jax.block_until_ready(out)

    # Reference check in plain JAX (row-major, PyTorch-style layout, f32).
    w1, b1, w2, b2, w3, b3 = params
    ref = jnp.tanh(x @ w1 + b1)
    ref = jnp.tanh(ref @ w2 + b2)
    ref = ref @ w3 + b3

    tol = 3e-2 if use_bf16 else 1e-5  # bf16 fast path on v6e/v7x, exact f32 elsewhere
    assert out.shape == (8, 1)
    assert jnp.allclose(out, ref, atol=tol, rtol=tol)

    print("KERNEL_OK")
</pallas_src>

<mosaic_0001>
module attributes {stable_mosaic.version = 11 : i64} {
  func.func @mlp_kernel(%arg0: i32, %arg1: memref<2x128xf32, #tpu.memory_space<vmem>>, %arg2: memref<32x4xf32, #tpu.memory_space<vmem>>, %arg3: memref<32x32xf32, #tpu.memory_space<vmem>>, %arg4: memref<1x32xf32, #tpu.memory_space<vmem>>, %arg5: memref<1x1xf32, #tpu.memory_space<smem>>, %arg6: memref<1x128xf32, #tpu.memory_space<vmem>>) attributes {dimension_semantics = [#tpu.dimension_semantics<parallel>], iteration_bounds = array<i64: 1>, scalar_prefetch = 0 : i64, scratch_operands = 0 : i64, tpu.core_type = #tpu.core_type<tc>, window_params = [{transform_indices = @transform_0, window_bounds = array<i64: 2, 128>}, {pipeline_mode = #tpu.pipeline_mode<synchronous>, transform_indices = @transform_1, window_bounds = array<i64: 32, 4>}, {pipeline_mode = #tpu.pipeline_mode<synchronous>, transform_indices = @transform_2, window_bounds = array<i64: 32, 32>}, {pipeline_mode = #tpu.pipeline_mode<synchronous>, transform_indices = @transform_3, window_bounds = array<i64: 1, 32>}, {transform_indices = @transform_4, window_bounds = array<i64: 1, 1>}, {transform_indices = @transform_5, window_bounds = array<i64: 1, 128>}]} {
    %c0 = arith.constant 0 : index
    %c0_0 = arith.constant 0 : index
    %0 = vector.load %arg1[%c0, %c0_0] : memref<2x128xf32, #tpu.memory_space<vmem>>, vector<2x128xf32>
    %c0_1 = arith.constant 0 : index
    %c0_2 = arith.constant 0 : index
    %1 = vector.load %arg2[%c0_1, %c0_2] : memref<32x4xf32, #tpu.memory_space<vmem>>, vector<32x4xf32>
    %2 = vector.extract_strided_slice %1 {offsets = [0, 0], sizes = [32, 1], strides = [1, 1]} : vector<32x4xf32> to vector<32x1xf32>
    %3 = vector.extract_strided_slice %1 {offsets = [0, 1], sizes = [32, 1], strides = [1, 1]} : vector<32x4xf32> to vector<32x1xf32>
    %4 = vector.extract_strided_slice %1 {offsets = [0, 2], sizes = [32, 1], strides = [1, 1]} : vector<32x4xf32> to vector<32x1xf32>
    %5 = vector.extract_strided_slice %1 {offsets = [0, 3], sizes = [32, 1], strides = [1, 1]} : vector<32x4xf32> to vector<32x1xf32>
    %6 = vector.extract_strided_slice %0 {offsets = [0, 0], sizes = [1, 128], strides = [1, 1]} : vector<2x128xf32> to vector<1x128xf32>
    %7 = vector.broadcast %2 : vector<32x1xf32> to vector<32x128xf32>
    %8 = vector.broadcast %6 : vector<1x128xf32> to vector<32x128xf32>
    %9 = arith.mulf %7, %8 : vector<32x128xf32>
    %10 = vector.extract_strided_slice %0 {offsets = [1, 0], sizes = [1, 128], strides = [1, 1]} : vector<2x128xf32> to vector<1x128xf32>
    %11 = vector.broadcast %3 : vector<32x1xf32> to vector<32x128xf32>
    %12 = vector.broadcast %10 : vector<1x128xf32> to vector<32x128xf32>
    %13 = arith.mulf %11, %12 : vector<32x128xf32>
    %14 = arith.addf %9, %13 : vector<32x128xf32>
    %15 = vector.broadcast %4 : vector<32x1xf32> to vector<32x128xf32>
    %16 = arith.addf %14, %15 : vector<32x128xf32>
    %17 = math.tanh %16 : vector<32x128xf32>
    %c0_3 = arith.constant 0 : index
    %c0_4 = arith.constant 0 : index
    %18 = vector.load %arg3[%c0_3, %c0_4] : memref<32x32xf32, #tpu.memory_space<vmem>>, vector<32x32xf32>
    %cst = arith.constant dense<0.000000e+00> : vector<32x128xf32>
    %19 = tpu.matmul %18, %17, %cst {dimension_numbers = #tpu.dot_dimension_numbers<[1], [0], [0], [1], [0, 0, 1, 1], [], []>, precision = #tpu.contract_precision<fp32>} : vector<32x32xf32>, vector<32x128xf32>, vector<32x128xf32> -> vector<32x128xf32>
    %20 = vector.broadcast %5 : vector<32x1xf32> to vector<32x128xf32>
    %21 = arith.addf %19, %20 : vector<32x128xf32>
    %22 = math.tanh %21 : vector<32x128xf32>
    %c0_5 = arith.constant 0 : index
    %c0_6 = arith.constant 0 : index
    %23 = vector.load %arg4[%c0_5, %c0_6] : memref<1x32xf32, #tpu.memory_space<vmem>>, vector<1x32xf32>
    %cst_7 = arith.constant dense<0.000000e+00> : vector<1x128xf32>
    %24 = tpu.matmul %23, %22, %cst_7 {dimension_numbers = #tpu.dot_dimension_numbers<[1], [0], [0], [1], [0, 0, 1, 1], [], []>, precision = #tpu.contract_precision<fp32>} : vector<1x32xf32>, vector<32x128xf32>, vector<1x128xf32> -> vector<1x128xf32>
    %c0_8 = arith.constant 0 : index
    %c0_9 = arith.constant 0 : index
    %25 = memref.load %arg5[%c0_8, %c0_9] : memref<1x1xf32, #tpu.memory_space<smem>>
    %26 = vector.broadcast %25 : f32 to vector<1x128xf32>
    %27 = arith.addf %24, %26 : vector<1x128xf32>
    %c0_10 = arith.constant 0 : index
    %c0_11 = arith.constant 0 : index
    %28 = vector.load %arg6[%c0_10, %c0_11] : memref<1x128xf32, #tpu.memory_space<vmem>>, vector<1x128xf32>
    tpu.vector_store %arg6[%c0_10, %c0_11], %27 {strides = array<i32>} : memref<1x128xf32, #tpu.memory_space<vmem>>, vector<1x128xf32>,
    return
  }
  func.func @transform_0(%arg0: i32) -> (i32, i32) {
    %c0_i32 = arith.constant 0 : i32
    %c0_i32_0 = arith.constant 0 : i32
    return %c0_i32, %arg0 : i32, i32
  }
  func.func @transform_1(%arg0: i32) -> (i32, i32) {
    %c0_i32 = arith.constant 0 : i32
    %c0_i32_0 = arith.constant 0 : i32
    %c0_i32_1 = arith.constant 0 : i32
    return %c0_i32, %c0_i32_0 : i32, i32
  }
  func.func @transform_2(%arg0: i32) -> (i32, i32) {
    %c0_i32 = arith.constant 0 : i32
    %c0_i32_0 = arith.constant 0 : i32
    %c0_i32_1 = arith.constant 0 : i32
    return %c0_i32, %c0_i32_0 : i32, i32
  }
  func.func @transform_3(%arg0: i32) -> (i32, i32) {
    %c0_i32 = arith.constant 0 : i32
    %c0_i32_0 = arith.constant 0 : i32
    %c0_i32_1 = arith.constant 0 : i32
    return %c0_i32, %c0_i32_0 : i32, i32
  }
  func.func @transform_4(%arg0: i32) -> (i32, i32) {
    %c0_i32 = arith.constant 0 : i32
    %c0_i32_0 = arith.constant 0 : i32
    %c0_i32_1 = arith.constant 0 : i32
    return %c0_i32, %c0_i32_0 : i32, i32
  }
  func.func @transform_5(%arg0: i32) -> (i32, i32) {
    %c0_i32 = arith.constant 0 : i32
    %c0_i32_0 = arith.constant 0 : i32
    return %c0_i32, %arg0 : i32, i32
  }
}

</mosaic_0001>

<llo_original>
// kernel: tpu_custom_call.1
$region0: #{tpu_custom_call.1}
  #allocation0 [shape = 'u32[]', space=smem, size = 0x4, offset = 0x4, fixed_abs, tag = 'smem constant byte address 0x4 - core index']
  #allocation1 [shape = 'u32[144,128]{1,0:T(1,128)}', space=vmem, size = 0x12000, scoped, tag = 'internal scratch']
  #allocation2 [shape = 'f32[1,1]{1,0:T(1,128)S(6)}', space=smem, size = 0x200, scoped, tag = 'scoped memory for tpu_custom_call.1']
  %s0 = inlined_call_operand.vmem [shape: f32[2,128], index: 0, kind: input, shape index: {}]
  %s1 = inlined_call_operand.vmem [shape: f32[32,4], index: 1, kind: input, shape index: {}]
  %s2 = inlined_call_operand.vmem [shape: f32[32,32], index: 2, kind: input, shape index: {}]
  %s3 = inlined_call_operand.vmem [shape: f32[1,32], index: 3, kind: input, shape index: {}]
  %s4 = inlined_call_operand.<no memory space> [shape: f32[1,1], index: 4, kind: input, shape index: {}]
  %s5 = inlined_call_operand.hbm [shape: f32[1,128], index: 5, kind: output, shape index: {}]
  %s6 = sld [smem:[#allocation0]]
  $region30: #{tpu_custom_call.1} parent=0
    _
  %s8 = ssub.s32 1, %s6
  %s9 = scalar_select 0, %s8, %s6
  %10 = sst [smem:[#allocation2]] %s4
  $region1: #{tpu_custom_call.1} parent=0
    #allocation3 [shape = 'u8[512]{0}', space=vmem, size = 0x400, scoped, tag = 'output window, operand 0, single buffered']
    #allocation4 [shape = 's32[1]{0}', space=sflag, size = 0x4, scoped, tag = 'scoped memory for tpu_custom_call.1']
    %11 = vsyncpa [#allocation4], 0
    // Predicated region
    $region2: #{tpu_custom_call.1} parent=1 // pred_check
      _
    $region3: #{tpu_custom_call.1} parent=1 // pred_check_branch
      %13 = sbr.rel (0) target = $region5
    $region4: #{tpu_custom_call.1} parent=1 // pred_region
      _
    $region5: #{tpu_custom_call.1} parent=1 // pred_fallthru
      _
    // Predicated region
    $region6: #{tpu_custom_call.1} parent=1 // pred_check
      _
    $region7: #{tpu_custom_call.1} parent=1 // pred_check_branch
      %15 = sbr.rel (0) target = $region9
    $region8: #{tpu_custom_call.1} parent=1 // pred_region
      _
    $region9: #{tpu_custom_call.1} parent=1 // pred_fallthru
      _
    // Predicated region
    $region10: #{tpu_custom_call.1} parent=1 // pred_check
      _
    $region11: #{tpu_custom_call.1} parent=1 // pred_check_branch
      %17 = sbr.rel (0) target = $region13
    $region12: #{tpu_custom_call.1} parent=1 // pred_region
      _
    $region13: #{tpu_custom_call.1} parent=1 // pred_fallthru
      _
    // Predicated region
    $region14: #{tpu_custom_call.1} parent=1 // pred_check
      _
    $region15: #{tpu_custom_call.1} parent=1 // pred_check_branch
      %19 = sbr.rel (0) target = $region17
    $region16: #{tpu_custom_call.1} parent=1 // pred_region
      _
    $region17: #{tpu_custom_call.1} parent=1 // pred_fallthru
      _
    // Predicated region
    $region18: #{tpu_custom_call.1} parent=1 // pred_check
      _
    $region19: #{tpu_custom_call.1} parent=1 // pred_check_branch
      %21 = sbr.rel (0) target = $region21
    $region20: #{tpu_custom_call.1} parent=1 // pred_region
      _
    $region21: #{tpu_custom_call.1} parent=1 // pred_fallthru
      _
    %v22 = vld [vmem:[%s0] sm:$0x3]
    %v23 = vld [vmem:[%s1] sm:$0xff]
    %v24 = vld [vmem:[%s1 + $0x8] sm:$0xff]
    %v25 = vld [vmem:[%s1 + $0x10] sm:$0xff]
    %v26 = vld [vmem:[%s1 + $0x18] sm:$0xff]
    %28 = vset.pattern.permute.xlu0 0
    %29 = vperm.xlu0 %28, %v23
    %v30 = vpop.permute.xlu0 %29
    %33 = vset.pattern.permute.xlu0 0
    %34 = vperm.xlu0 %33, %v24
    %v35 = vpop.permute.xlu0 %34
    %38 = vset.pattern.permute.xlu0 0
    %39 = vperm.xlu0 %38, %v25
    %v40 = vpop.permute.xlu0 %39
    %43 = vset.pattern.permute.xlu0 0
    %44 = vperm.xlu0 %43, %v26
    %v45 = vpop.permute.xlu0 %44
    %v47 = vlaneseq
    %v48 = vshrl.u32 %v47, 7
    %v49 = vsub.s32 0, %v48
    %v50 = vrot.slane %v22, %v49
    %v51 = vmul.f32 %v30, %v50
    %v52 = vmul.f32 %v35, %v50
    %v53 = vmul.f32 %v40, %v50
    %v54 = vmul.f32 %v45, %v50
    %55 = vset.pattern.permute.xlu0 1
    %56 = vperm.xlu0 %55, %v23
    %v57 = vpop.permute.xlu0 %56
    %59 = vset.pattern.permute.xlu0 1
    %60 = vperm.xlu0 %59, %v24
    %v61 = vpop.permute.xlu0 %60
    %63 = vset.pattern.permute.xlu0 1
    %64 = vperm.xlu0 %63, %v25
    %v65 = vpop.permute.xlu0 %64
    %67 = vset.pattern.permute.xlu0 1
    %68 = vperm.xlu0 %67, %v26
    %v69 = vpop.permute.xlu0 %68
    %v71 = vlaneseq
    %v72 = vshrl.u32 %v71, 7
    %v73 = vsub.s32 1, %v72
    %v74 = vrot.slane %v22, %v73
    %v75 = vmul.f32 %v57, %v74
    %v76 = vmul.f32 %v61, %v74
    %v77 = vmul.f32 %v65, %v74
    %v78 = vmul.f32 %v69, %v74
    %v79 = vadd.f32 %v51, %v75
    %v80 = vadd.f32 %v52, %v76
    %v81 = vadd.f32 %v53, %v77
    %v82 = vadd.f32 %v54, %v78
    %83 = vset.pattern.permute.xlu0 2
    %84 = vperm.xlu0 %83, %v23
    %v85 = vpop.permute.xlu0 %84
    %87 = vset.pattern.permute.xlu0 2
    %88 = vperm.xlu0 %87, %v24
    %v89 = vpop.permute.xlu0 %88
    %91 = vset.pattern.permute.xlu0 2
    %92 = vperm.xlu0 %91, %v25
    %v93 = vpop.permute.xlu0 %92
    %95 = vset.pattern.permute.xlu0 2
    %96 = vperm.xlu0 %95, %v26
    %v97 = vpop.permute.xlu0 %96
    %v99 = vadd.f32 %v79, %v85
    %v100 = vadd.f32 %v80, %v89
    %v101 = vadd.f32 %v81, %v93
    %v102 = vadd.f32 %v82, %v97
    %v103 = vtanh.pop %v99
    %v104 = vtanh.pop %v100
    %v105 = vtanh.pop %v101
    %v106 = vtanh.pop %v102
    %v107 = vld [vmem:[%s2] sm:$0xff]
    %v108 = vld [vmem:[%s2 + $0x8] sm:$0xff]
    %v109 = vld [vmem:[%s2 + $0x10] sm:$0xff]
    %v110 = vld [vmem:[%s2 + $0x18] sm:$0xff]
    %111 = vset.pattern.permute.xlu0 3
    %112 = vperm.xlu0 %111, %v23
    %v113 = vpop.permute.xlu0 %112
    %115 = vset.pattern.permute.xlu0 3
    %116 = vperm.xlu0 %115, %v24
    %v117 = vpop.permute.xlu0 %116
    %119 = vset.pattern.permute.xlu0 3
    %120 = vperm.xlu0 %119, %v25
    %v121 = vpop.permute.xlu0 %120
    %123 = vset.pattern.permute.xlu0 3
    %124 = vperm.xlu0 %123, %v26
    %v125 = vpop.permute.xlu0 %124
    %vm127 = vcmask 261120
    %v129 = vsel %vm127, %v107, 0
    %v132 = vsel %vm127, %v108, 0
    %v135 = vsel %vm127, %v109, 0
    %v138 = vsel %vm127, %v110, 0
    %140 = vmatprep.subr.mxu0 0.0
    %141 = vmatpush1.msra.mxu0 0.0
    %142 = vmatprep.subr.mxu0 0.0
    %143 = vmatpush1.msra.mxu0 0.0
    %144 = vmatprep.subr.mxu0 0.0
    %145 = vmatpush1.msra.mxu0 0.0
    %146 = vmatprep.subr.mxu0 0.0
    %147 = vmatpush1.msra.mxu0 0.0
    %148 = vmatprep.subr.mxu0 0.0
    %149 = vmatpush1.msra.mxu0 0.0
    %150 = vmatprep.subr.mxu0 0.0
    %151 = vmatpush1.msra.mxu0 0.0
    %152 = vmatprep.subr.mxu0 0.0
    %153 = vmatpush1.msra.mxu0 0.0
    %154 = vmatprep.subr.mxu0 0.0
    %155 = vmatpush1.msra.mxu0 0.0
    %156 = vmatprep.subr.mxu0 0.0
    %157 = vmatpush1.msra.mxu0 0.0
    %158 = vmatprep.subr.mxu0 0.0
    %159 = vmatpush1.msra.mxu0 0.0
    %160 = vmatprep.subr.mxu0 0.0
    %161 = vmatpush1.msra.mxu0 0.0
    %162 = vmatprep.subr.mxu0 0.0
    %163 = vmatpush1.msra.mxu0 0.0
    %164 = vmatprep.subr.mxu0 0.0
    %v165 = vand.u32 %v106, 4294901760
    %166 = vmatpush1.msra.mxu0 %v165
    %167 = vmatprep.subr.mxu0 0.0
    %v168 = vand.u32 %v105, 4294901760
    %169 = vmatpush1.msra.mxu0 %v168
    %170 = vmatprep.subr.mxu0 0.0
    %v171 = vand.u32 %v104, 4294901760
    %172 = vmatpush1.msra.mxu0 %v171
    %173 = vmatprep.subr.mxu0 0.0
    %v174 = vand.u32 %v103, 4294901760
    %175 = vmatpush1.msra.mxu0 %v174
    %176 = vmatprep.subr.mxu0 0.0
    %177 = vmatpush2.msra.mxu0 0.0
    %178 = vmatprep.subr.mxu0 0.0
    %179 = vmatpush2.msra.mxu0 0.0
    %180 = vmatprep.subr.mxu0 0.0
    %181 = vmatpush2.msra.mxu0 0.0
    %182 = vmatprep.subr.mxu0 0.0
    %183 = vmatpush2.msra.mxu0 0.0
    %184 = vmatprep.subr.mxu0 0.0
    %185 = vmatpush2.msra.mxu0 0.0
    %186 = vmatprep.subr.mxu0 0.0
    %187 = vmatpush2.msra.mxu0 0.0
    %188 = vmatprep.subr.mxu0 0.0
    %189 = vmatpush2.msra.mxu0 0.0
    %190 = vmatprep.subr.mxu0 0.0
    %191 = vmatpush2.msra.mxu0 0.0
    %192 = vmatprep.subr.mxu0 0.0
    %193 = vmatpush2.msra.mxu0 0.0
    %194 = vmatprep.subr.mxu0 0.0
    %195 = vmatpush2.msra.mxu0 0.0
    %196 = vmatprep.subr.mxu0 0.0
    %197 = vmatpush2.msra.mxu0 0.0
    %198 = vmatprep.subr.mxu0 0.0
    %199 = vmatpush2.msra.mxu0 0.0
    %200 = vmatprep.subr.mxu0 0.0
    %201 = vmatpush2.msra.mxu0 0.0
    %202 = vmatprep.subr.mxu0 0.0
    %203 = vmatpush2.msra.mxu0 0.0
    %204 = vmatprep.subr.mxu0 0.0
    %205 = vmatpush2.msra.mxu0 0.0
    %206 = vmatprep.subr.mxu0 0.0
    %207 = vmatpush2.msra.mxu0 0.0
    %208 = vmatprep.mubr.f32.mxu0 0.0
    %v209 = vand.u32 %v129, 4294901760
    %v210 = vsub.f32 %v129, %v209
    %v211 = vand.u32 %v210, 4294901760
    %v212 = vsub.f32 %v210, %v211
    %v213 = vand.u32 %v212, 4294901760
    %214 = vmatmul.mubr.f32.gmra.mxu0 %v213
    %v215 = vpop.f32.mrf.mxu0
    %v216 = vadd.f32 %v113, %v215
    %v217 = vpop.f32.mrf.mxu0
    %218 = vmatprep.mubr.f32.mxu0 0.0
    %v219 = vand.u32 %v132, 4294901760
    %v220 = vsub.f32 %v132, %v219
    %v221 = vand.u32 %v220, 4294901760
    %v222 = vsub.f32 %v220, %v221
    %v223 = vand.u32 %v222, 4294901760
    %224 = vmatmul.mubr.f32.gmra.mxu0 %v223
    %v225 = vpop.f32.mrf.mxu0
    %v226 = vadd.f32 %v117, %v225
    %v227 = vpop.f32.mrf.mxu0
    %228 = vmatprep.mubr.f32.mxu0 0.0
    %v229 = vand.u32 %v135, 4294901760
    %v230 = vsub.f32 %v135, %v229
    %v231 = vand.u32 %v230, 4294901760
    %v232 = vsub.f32 %v230, %v231
    %v233 = vand.u32 %v232, 4294901760
    %234 = vmatmul.mubr.f32.gmra.mxu0 %v233
    %v235 = vpop.f32.mrf.mxu0
    %v236 = vadd.f32 %v121, %v235
    %v237 = vpop.f32.mrf.mxu0
    %238 = vmatprep.mubr.f32.mxu0 0.0
    %v239 = vand.u32 %v138, 4294901760
    %v240 = vsub.f32 %v138, %v239
    %v241 = vand.u32 %v240, 4294901760
    %v242 = vsub.f32 %v240, %v241
    %v243 = vand.u32 %v242, 4294901760
    %244 = vmatmul.mubr.f32.gmra.mxu0 %v243
    %v245 = vpop.f32.mrf.mxu0
    %v246 = vadd.f32 %v125, %v245
    %v247 = vpop.f32.mrf.mxu0
    %248 = vdwg.mxu0
    %249 = vmatprep.subr.mxu0 0.0
    %250 = vmatpush1.msra.mxu0 0.0
    %251 = vmatprep.subr.mxu0 0.0
    %252 = vmatpush1.msra.mxu0 0.0
    %253 = vmatprep.subr.mxu0 0.0
    %254 = vmatpush1.msra.mxu0 0.0
    %255 = vmatprep.subr.mxu0 0.0
    %256 = vmatpush1.msra.mxu0 0.0
    %257 = vmatprep.subr.mxu0 0.0
    %258 = vmatpush1.msra.mxu0 0.0
    %259 = vmatprep.subr.mxu0 0.0
    %260 = vmatpush1.msra.mxu0 0.0
    %261 = vmatprep.subr.mxu0 0.0
    %262 = vmatpush1.msra.mxu0 0.0
    %263 = vmatprep.subr.mxu0 0.0
    %264 = vmatpush1.msra.mxu0 0.0
    %265 = vmatprep.subr.mxu0 0.0
    %266 = vmatpush1.msra.mxu0 0.0
    %267 = vmatprep.subr.mxu0 0.0
    %268 = vmatpush1.msra.mxu0 0.0
    %269 = vmatprep.subr.mxu0 0.0
    %270 = vmatpush1.msra.mxu0 0.0
    %271 = vmatprep.subr.mxu0 0.0
    %272 = vmatpush1.msra.mxu0 0.0
    %273 = vmatprep.subr.mxu0 0.0
    %v274 = vand.u32 %v106, 4294901760
    %v275 = vsub.f32 %v106, %v274
    %v276 = vand.u32 %v275, 4294901760
    %v277 = vsub.f32 %v275, %v276
    %v278 = vand.u32 %v277, 4294901760
    %279 = vmatpush1.msra.mxu0 %v278
    %280 = vmatprep.subr.mxu0 0.0
    %v281 = vand.u32 %v105, 4294901760
    %v282 = vsub.f32 %v105, %v281
    %v283 = vand.u32 %v282, 4294901760
    %v284 = vsub.f32 %v282, %v283
    %v285 = vand.u32 %v284, 4294901760
    %286 = vmatpush1.msra.mxu0 %v285
    %287 = vmatprep.subr.mxu0 0.0
    %v288 = vand.u32 %v104, 4294901760
    %v289 = vsub.f32 %v104, %v288
    %v290 = vand.u32 %v289, 4294901760
    %v291 = vsub.f32 %v289, %v290
    %v292 = vand.u32 %v291, 4294901760
    %293 = vmatpush1.msra.mxu0 %v292
    %294 = vmatprep.subr.mxu0 0.0
    %v295 = vand.u32 %v103, 4294901760
    %v296 = vsub.f32 %v103, %v295
    %v297 = vand.u32 %v296, 4294901760
    %v298 = vsub.f32 %v296, %v297
    %v299 = vand.u32 %v298, 4294901760
    %300 = vmatpush1.msra.mxu0 %v299
    %301 = vmatprep.subr.mxu0 0.0
    %302 = vmatpush2.msra.mxu0 0.0
    %303 = vmatprep.subr.mxu0 0.0
    %304 = vmatpush2.msra.mxu0 0.0
    %305 = vmatprep.subr.mxu0 0.0
    %306 = vmatpush2.msra.mxu0 0.0
    %307 = vmatprep.subr.mxu0 0.0
    %308 = vmatpush2.msra.mxu0 0.0
    %309 = vmatprep.subr.mxu0 0.0
    %310 = vmatpush2.msra.mxu0 0.0
    %311 = vmatprep.subr.mxu0 0.0
    %312 = vmatpush2.msra.mxu0 0.0
    %313 = vmatprep.subr.mxu0 0.0
    %314 = vmatpush2.msra.mxu0 0.0
    %315 = vmatprep.subr.mxu0 0.0
    %316 = vmatpush2.msra.mxu0 0.0
    %317 = vmatprep.subr.mxu0 0.0
    %318 = vmatpush2.msra.mxu0 0.0
    %319 = vmatprep.subr.mxu0 0.0
    %320 = vmatpush2.msra.mxu0 0.0
    %321 = vmatprep.subr.mxu0 0.0
    %322 = vmatpush2.msra.mxu0 0.0
    %323 = vmatprep.subr.mxu0 0.0
    %324 = vmatpush2.msra.mxu0 0.0
    %325 = vmatprep.subr.mxu0 0.0
    %326 = vmatpush2.msra.mxu0 0.0
    %327 = vmatprep.subr.mxu0 0.0
    %328 = vmatpush2.msra.mxu0 0.0
    %329 = vmatprep.subr.mxu0 0.0
    %330 = vmatpush2.msra.mxu0 0.0
    %331 = vmatprep.subr.mxu0 0.0
    %332 = vmatpush2.msra.mxu0 0.0
    %333 = vmatprep.mubr.f32.mxu0 0.0
    %v334 = vand.u32 %v129, 4294901760
    %335 = vmatmul.mubr.f32.gmra.mxu0 %v334
    %v336 = vpop.f32.mrf.mxu0
    %v337 = vadd.f32 %v216, %v336
    %v338 = vpop.f32.mrf.mxu0
    %339 = vmatprep.mubr.f32.mxu0 0.0
    %v340 = vand.u32 %v132, 4294901760
    %341 = vmatmul.mubr.f32.gmra.mxu0 %v340
    %v342 = vpop.f32.mrf.mxu0
    %v343 = vadd.f32 %v226, %v342
    %v344 = vpop.f32.mrf.mxu0
    %345 = vmatprep.mubr.f32.mxu0 0.0
    %v346 = vand.u32 %v135, 4294901760
    %347 = vmatmul.mubr.f32.gmra.mxu0 %v346
    %v348 = vpop.f32.mrf.mxu0
    %v349 = vadd.f32 %v236, %v348
    %v350 = vpop.f32.mrf.mxu0
    %351 = vmatprep.mubr.f32.mxu0 0.0
    %v352 = vand.u32 %v138, 4294901760
    %353 = vmatmul.mubr.f32.gmra.mxu0 %v352
    %v354 = vpop.f32.mrf.mxu0
    %v355 = vadd.f32 %v246, %v354
    %v356 = vpop.f32.mrf.mxu0
    %357 = vdwg.mxu0
    %358 = vmatprep.subr.mxu0 0.0
    %359 = vmatpush1.msra.mxu0 0.0
    %360 = vmatprep.subr.mxu0 0.0
    %361 = vmatpush1.msra.mxu0 0.0
    %362 = vmatprep.subr.mxu0 0.0
    %363 = vmatpush1.msra.mxu0 0.0
    %364 = vmatprep.subr.mxu0 0.0
    %365 = vmatpush1.msra.mxu0 0.0
    %366 = vmatprep.subr.mxu0 0.0
    %367 = vmatpush1.msra.mxu0 0.0
    %368 = vmatprep.subr.mxu0 0.0
    %369 = vmatpush1.msra.mxu0 0.0
    %370 = vmatprep.subr.mxu0 0.0
    %371 = vmatpush1.msra.mxu0 0.0
    %372 = vmatprep.subr.mxu0 0.0
    %373 = vmatpush1.msra.mxu0 0.0
    %374 = vmatprep.subr.mxu0 0.0
    %375 = vmatpush1.msra.mxu0 0.0
    %376 = vmatprep.subr.mxu0 0.0
    %377 = vmatpush1.msra.mxu0 0.0
    %378 = vmatprep.subr.mxu0 0.0
    %379 = vmatpush1.msra.mxu0 0.0
    %380 = vmatprep.subr.mxu0 0.0
    %381 = vmatpush1.msra.mxu0 0.0
    %382 = vmatprep.subr.mxu0 0.0
    %v383 = vand.u32 %v106, 4294901760
    %v384 = vsub.f32 %v106, %v383
    %385 = vmatpush1.msra.mxu0 %v384
    %386 = vmatprep.subr.mxu0 0.0
    %v387 = vand.u32 %v105, 4294901760
    %v388 = vsub.f32 %v105, %v387
    %389 = vmatpush1.msra.mxu0 %v388
    %390 = vmatprep.subr.mxu0 0.0
    %v391 = vand.u32 %v104, 4294901760
    %v392 = vsub.f32 %v104, %v391
    %393 = vmatpush1.msra.mxu0 %v392
    %394 = vmatprep.subr.mxu0 0.0
    %v395 = vand.u32 %v103, 4294901760
    %v396 = vsub.f32 %v103, %v395
    %397 = vmatpush1.msra.mxu0 %v396
    %398 = vmatprep.subr.mxu0 0.0
    %399 = vmatpush2.msra.mxu0 0.0
    %400 = vmatprep.subr.mxu0 0.0
    %401 = vmatpush2.msra.mxu0 0.0
    %402 = vmatprep.subr.mxu0 0.0
    %403 = vmatpush2.msra.mxu0 0.0
    %404 = vmatprep.subr.mxu0 0.0
    %405 = vmatpush2.msra.mxu0 0.0
    %406 = vmatprep.subr.mxu0 0.0
    %407 = vmatpush2.msra.mxu0 0.0
    %408 = vmatprep.subr.mxu0 0.0
    %409 = vmatpush2.msra.mxu0 0.0
    %410 = vmatprep.subr.mxu0 0.0
    %411 = vmatpush2.msra.mxu0 0.0
    %412 = vmatprep.subr.mxu0 0.0
    %413 = vmatpush2.msra.mxu0 0.0
    %414 = vmatprep.subr.mxu0 0.0
    %415 = vmatpush2.msra.mxu0 0.0
    %416 = vmatprep.subr.mxu0 0.0
    %417 = vmatpush2.msra.mxu0 0.0
    %418 = vmatprep.subr.mxu0 0.0
    %419 = vmatpush2.msra.mxu0 0.0
    %420 = vmatprep.subr.mxu0 0.0
    %421 = vmatpush2.msra.mxu0 0.0
    %422 = vmatprep.subr.mxu0 0.0
    %423 = vmatpush2.msra.mxu0 0.0
    %424 = vmatprep.subr.mxu0 0.0
    %425 = vmatpush2.msra.mxu0 0.0
    %426 = vmatprep.subr.mxu0 0.0
    %427 = vmatpush2.msra.mxu0 0.0
    %428 = vmatprep.subr.mxu0 0.0
    %429 = vmatpush2.msra.mxu0 0.0
    %430 = vmatprep.mubr.f32.mxu0 0.0
    %v431 = vand.u32 %v129, 4294901760
    %v432 = vsub.f32 %v129, %v431
    %433 = vmatmul.mubr.f32.gmra.mxu0 %v432
    %v434 = vpop.f32.mrf.mxu0
    %v435 = vadd.f32 %v337, %v434
    %v436 = vpop.f32.mrf.mxu0
    %437 = vmatprep.mubr.f32.mxu0 0.0
    %v438 = vand.u32 %v132, 4294901760
    %v439 = vsub.f32 %v132, %v438
    %440 = vmatmul.mubr.f32.gmra.mxu0 %v439
    %v441 = vpop.f32.mrf.mxu0
    %v442 = vadd.f32 %v343, %v441
    %v443 = vpop.f32.mrf.mxu0
    %444 = vmatprep.mubr.f32.mxu0 0.0
    %v445 = vand.u32 %v135, 4294901760
    %v446 = vsub.f32 %v135, %v445
    %447 = vmatmul.mubr.f32.gmra.mxu0 %v446
    %v448 = vpop.f32.mrf.mxu0
    %v449 = vadd.f32 %v349, %v448
    %v450 = vpop.f32.mrf.mxu0
    %451 = vmatprep.mubr.f32.mxu0 0.0
    %v452 = vand.u32 %v138, 4294901760
    %v453 = vsub.f32 %v138, %v452
    %454 = vmatmul.mubr.f32.gmra.mxu0 %v453
    %v455 = vpop.f32.mrf.mxu0
    %v456 = vadd.f32 %v355, %v455
    %v457 = vpop.f32.mrf.mxu0
    %458 = vdwg.mxu0
    %459 = vmatprep.subr.mxu0 0.0
    %460 = vmatpush1.msra.mxu0 0.0
    %461 = vmatprep.subr.mxu0 0.0
    %462 = vmatpush1.msra.mxu0 0.0
    %463 = vmatprep.subr.mxu0 0.0
    %464 = vmatpush1.msra.mxu0 0.0
    %465 = vmatprep.subr.mxu0 0.0
    %466 = vmatpush1.msra.mxu0 0.0
    %467 = vmatprep.subr.mxu0 0.0
    %468 = vmatpush1.msra.mxu0 0.0
    %469 = vmatprep.subr.mxu0 0.0
    %470 = vmatpush1.msra.mxu0 0.0
    %471 = vmatprep.subr.mxu0 0.0
    %472 = vmatpush1.msra.mxu0 0.0
    %473 = vmatprep.subr.mxu0 0.0
    %474 = vmatpush1.msra.mxu0 0.0
    %475 = vmatprep.subr.mxu0 0.0
    %476 = vmatpush1.msra.mxu0 0.0
    %477 = vmatprep.subr.mxu0 0.0
    %478 = vmatpush1.msra.mxu0 0.0
    %479 = vmatprep.subr.mxu0 0.0
    %480 = vmatpush1.msra.mxu0 0.0
    %481 = vmatprep.subr.mxu0 0.0
    %482 = vmatpush1.msra.mxu0 0.0
    %483 = vmatprep.subr.mxu0 0.0
    %v484 = vand.u32 %v106, 4294901760
    %485 = vmatpush1.msra.mxu0 %v484
    %486 = vmatprep.subr.mxu0 0.0
    %v487 = vand.u32 %v105, 4294901760
    %488 = vmatpush1.msra.mxu0 %v487
    %489 = vmatprep.subr.mxu0 0.0
    %v490 = vand.u32 %v104, 4294901760
    %491 = vmatpush1.msra.mxu0 %v490
    %492 = vmatprep.subr.mxu0 0.0
    %v493 = vand.u32 %v103, 4294901760
    %494 = vmatpush1.msra.mxu0 %v493
    %495 = vmatprep.subr.mxu0 0.0
    %496 = vmatpush2.msra.mxu0 0.0
    %497 = vmatprep.subr.mxu0 0.0
    %498 = vmatpush2.msra.mxu0 0.0
    %499 = vmatprep.subr.mxu0 0.0
    %500 = vmatpush2.msra.mxu0 0.0
    %501 = vmatprep.subr.mxu0 0.0
    %502 = vmatpush2.msra.mxu0 0.0
    %503 = vmatprep.subr.mxu0 0.0
    %504 = vmatpush2.msra.mxu0 0.0
    %505 = vmatprep.subr.mxu0 0.0
    %506 = vmatpush2.msra.mxu0 0.0
    %507 = vmatprep.subr.mxu0 0.0
    %508 = vmatpush2.msra.mxu0 0.0
    %509 = vmatprep.subr.mxu0 0.0
    %510 = vmatpush2.msra.mxu0 0.0
    %511 = vmatprep.subr.mxu0 0.0
    %512 = vmatpush2.msra.mxu0 0.0
    %513 = vmatprep.subr.mxu0 0.0
    %514 = vmatpush2.msra.mxu0 0.0
    %515 = vmatprep.subr.mxu0 0.0
    %516 = vmatpush2.msra.mxu0 0.0
    %517 = vmatprep.subr.mxu0 0.0
    %518 = vmatpush2.msra.mxu0 0.0
    %519 = vmatprep.subr.mxu0 0.0
    %520 = vmatpush2.msra.mxu0 0.0
    %521 = vmatprep.subr.mxu0 0.0
    %522 = vmatpush2.msra.mxu0 0.0
    %523 = vmatprep.subr.mxu0 0.0
    %524 = vmatpush2.msra.mxu0 0.0
    %525 = vmatprep.subr.mxu0 0.0
    %526 = vmatpush2.msra.mxu0 0.0
    %527 = vmatprep.mubr.f32.mxu0 0.0
    %v528 = vand.u32 %v129, 4294901760
    %v529 = vsub.f32 %v129, %v528
    %v530 = vand.u32 %v529, 4294901760
    %531 = vmatmul.mubr.f32.gmra.mxu0 %v530
    %v532 = vpop.f32.mrf.mxu0
    %v533 = vadd.f32 %v435, %v532
    %v534 = vpop.f32.mrf.mxu0
    %535 = vmatprep.mubr.f32.mxu0 0.0
    %v536 = vand.u32 %v132, 4294901760
    %v537 = vsub.f32 %v132, %v536
    %v538 = vand.u32 %v537, 4294901760
    %539 = vmatmul.mubr.f32.gmra.mxu0 %v538
    %v540 = vpop.f32.mrf.mxu0
    %v541 = vadd.f32 %v442, %v540
    %v542 = vpop.f32.mrf.mxu0
    %543 = vmatprep.mubr.f32.mxu0 0.0
    %v544 = vand.u32 %v135, 4294901760
    %v545 = vsub.f32 %v135, %v544
    %v546 = vand.u32 %v545, 4294901760
    %547 = vmatmul.mubr.f32.gmra.mxu0 %v546
    %v548 = vpop.f32.mrf.mxu0
    %v549 = vadd.f32 %v449, %v548
    %v550 = vpop.f32.mrf.mxu0
    %551 = vmatprep.mubr.f32.mxu0 0.0
    %v552 = vand.u32 %v138, 4294901760
    %v553 = vsub.f32 %v138, %v552
    %v554 = vand.u32 %v553, 4294901760
    %555 = vmatmul.mubr.f32.gmra.mxu0 %v554
    %v556 = vpop.f32.mrf.mxu0
    %v557 = vadd.f32 %v456, %v556
    %v558 = vpop.f32.mrf.mxu0
    %559 = vdwg.mxu0
    %560 = vmatprep.subr.mxu0 0.0
    %561 = vmatpush1.msra.mxu0 0.0
    %562 = vmatprep.subr.mxu0 0.0
    %563 = vmatpush1.msra.mxu0 0.0
    %564 = vmatprep.subr.mxu0 0.0
    %565 = vmatpush1.msra.mxu0 0.0
    %566 = vmatprep.subr.mxu0 0.0
    %567 = vmatpush1.msra.mxu0 0.0
    %568 = vmatprep.subr.mxu0 0.0
    %569 = vmatpush1.msra.mxu0 0.0
    %570 = vmatprep.subr.mxu0 0.0
    %571 = vmatpush1.msra.mxu0 0.0
    %572 = vmatprep.subr.mxu0 0.0
    %573 = vmatpush1.msra.mxu0 0.0
    %574 = vmatprep.subr.mxu0 0.0
    %575 = vmatpush1.msra.mxu0 0.0
    %576 = vmatprep.subr.mxu0 0.0
    %577 = vmatpush1.msra.mxu0 0.0
    %578 = vmatprep.subr.mxu0 0.0
    %579 = vmatpush1.msra.mxu0 0.0
    %580 = vmatprep.subr.mxu0 0.0
    %581 = vmatpush1.msra.mxu0 0.0
    %582 = vmatprep.subr.mxu0 0.0
    %583 = vmatpush1.msra.mxu0 0.0
    %584 = vmatprep.subr.mxu0 0.0
    %v585 = vand.u32 %v106, 4294901760
    %v586 = vsub.f32 %v106, %v585
    %v587 = vand.u32 %v586, 4294901760
    %588 = vmatpush1.msra.mxu0 %v587
    %589 = vmatprep.subr.mxu0 0.0
    %v590 = vand.u32 %v105, 4294901760
    %v591 = vsub.f32 %v105, %v590
    %v592 = vand.u32 %v591, 4294901760
    %593 = vmatpush1.msra.mxu0 %v592
    %594 = vmatprep.subr.mxu0 0.0
    %v595 = vand.u32 %v104, 4294901760
    %v596 = vsub.f32 %v104, %v595
    %v597 = vand.u32 %v596, 4294901760
    %598 = vmatpush1.msra.mxu0 %v597
    %599 = vmatprep.subr.mxu0 0.0
    %v600 = vand.u32 %v103, 4294901760
    %v601 = vsub.f32 %v103, %v600
    %v602 = vand.u32 %v601, 4294901760
    %603 = vmatpush1.msra.mxu0 %v602
    %604 = vmatprep.subr.mxu0 0.0
    %605 = vmatpush2.msra.mxu0 0.0
    %606 = vmatprep.subr.mxu0 0.0
    %607 = vmatpush2.msra.mxu0 0.0
    %608 = vmatprep.subr.mxu0 0.0
    %609 = vmatpush2.msra.mxu0 0.0
    %610 = vmatprep.subr.mxu0 0.0
    %611 = vmatpush2.msra.mxu0 0.0
    %612 = vmatprep.subr.mxu0 0.0
    %613 = vmatpush2.msra.mxu0 0.0
    %614 = vmatprep.subr.mxu0 0.0
    %615 = vmatpush2.msra.mxu0 0.0
    %616 = vmatprep.subr.mxu0 0.0
    %617 = vmatpush2.msra.mxu0 0.0
    %618 = vmatprep.subr.mxu0 0.0
    %619 = vmatpush2.msra.mxu0 0.0
    %620 = vmatprep.subr.mxu0 0.0
    %621 = vmatpush2.msra.mxu0 0.0
    %622 = vmatprep.subr.mxu0 0.0
    %623 = vmatpush2.msra.mxu0 0.0
    %624 = vmatprep.subr.mxu0 0.0
    %625 = vmatpush2.msra.mxu0 0.0
    %626 = vmatprep.subr.mxu0 0.0
    %627 = vmatpush2.msra.mxu0 0.0
    %628 = vmatprep.subr.mxu0 0.0
    %629 = vmatpush2.msra.mxu0 0.0
    %630 = vmatprep.subr.mxu0 0.0
    %631 = vmatpush2.msra.mxu0 0.0
    %632 = vmatprep.subr.mxu0 0.0
    %633 = vmatpush2.msra.mxu0 0.0
    %634 = vmatprep.subr.mxu0 0.0
    %635 = vmatpush2.msra.mxu0 0.0
    %636 = vmatprep.mubr.f32.mxu0 0.0
    %v637 = vand.u32 %v129, 4294901760
    %638 = vmatmul.mubr.f32.gmra.mxu0 %v637
    %v639 = vpop.f32.mrf.mxu0
    %v640 = vadd.f32 %v533, %v639
    %v641 = vpop.f32.mrf.mxu0
    %642 = vmatprep.mubr.f32.mxu0 0.0
    %v643 = vand.u32 %v132, 4294901760
    %644 = vmatmul.mubr.f32.gmra.mxu0 %v643
    %v645 = vpop.f32.mrf.mxu0
    %v646 = vadd.f32 %v541, %v645
    %v647 = vpop.f32.mrf.mxu0
    %648 = vmatprep.mubr.f32.mxu0 0.0
    %v649 = vand.u32 %v135, 4294901760
    %650 = vmatmul.mubr.f32.gmra.mxu0 %v649
    %v651 = vpop.f32.mrf.mxu0
    %v652 = vadd.f32 %v549, %v651
    %v653 = vpop.f32.mrf.mxu0
    %654 = vmatprep.mubr.f32.mxu0 0.0
    %v655 = vand.u32 %v138, 4294901760
    %656 = vmatmul.mubr.f32.gmra.mxu0 %v655
    %v657 = vpop.f32.mrf.mxu0
    %v658 = vadd.f32 %v557, %v657
    %v659 = vpop.f32.mrf.mxu0
    %660 = vdwg.mxu0
    %661 = vmatprep.subr.mxu0 0.0
    %662 = vmatpush1.msra.mxu0 0.0
    %663 = vmatprep.subr.mxu0 0.0
    %664 = vmatpush1.msra.mxu0 0.0
    %665 = vmatprep.subr.mxu0 0.0
    %666 = vmatpush1.msra.mxu0 0.0
    %667 = vmatprep.subr.mxu0 0.0
    %668 = vmatpush1.msra.mxu0 0.0
    %669 = vmatprep.subr.mxu0 0.0
    %670 = vmatpush1.msra.mxu0 0.0
    %671 = vmatprep.subr.mxu0 0.0
    %672 = vmatpush1.msra.mxu0 0.0
    %673 = vmatprep.subr.mxu0 0.0
    %674 = vmatpush1.msra.mxu0 0.0
    %675 = vmatprep.subr.mxu0 0.0
    %676 = vmatpush1.msra.mxu0 0.0
    %677 = vmatprep.subr.mxu0 0.0
    %678 = vmatpush1.msra.mxu0 0.0
    %679 = vmatprep.subr.mxu0 0.0
    %680 = vmatpush1.msra.mxu0 0.0
    %681 = vmatprep.subr.mxu0 0.0
    %682 = vmatpush1.msra.mxu0 0.0
    %683 = vmatprep.subr.mxu0 0.0
    %684 = vmatpush1.msra.mxu0 0.0
    %685 = vmatprep.subr.mxu0 0.0
    %v686 = vand.u32 %v106, 4294901760
    %687 = vmatpush1.msra.mxu0 %v686
    %688 = vmatprep.subr.mxu0 0.0
    %v689 = vand.u32 %v105, 4294901760
    %690 = vmatpush1.msra.mxu0 %v689
    %691 = vmatprep.subr.mxu0 0.0
    %v692 = vand.u32 %v104, 4294901760
    %693 = vmatpush1.msra.mxu0 %v692
    %694 = vmatprep.subr.mxu0 0.0
    %v695 = vand.u32 %v103, 4294901760
    %696 = vmatpush1.msra.mxu0 %v695
    %697 = vmatprep.subr.mxu0 0.0
    %698 = vmatpush2.msra.mxu0 0.0
    %699 = vmatprep.subr.mxu0 0.0
    %700 = vmatpush2.msra.mxu0 0.0
    %701 = vmatprep.subr.mxu0 0.0
    %702 = vmatpush2.msra.mxu0 0.0
    %703 = vmatprep.subr.mxu0 0.0
    %704 = vmatpush2.msra.mxu0 0.0
    %705 = vmatprep.subr.mxu0 0.0
    %706 = vmatpush2.msra.mxu0 0.0
    %707 = vmatprep.subr.mxu0 0.0
    %708 = vmatpush2.msra.mxu0 0.0
    %709 = vmatprep.subr.mxu0 0.0
    %710 = vmatpush2.msra.mxu0 0.0
    %711 = vmatprep.subr.mxu0 0.0
    %712 = vmatpush2.msra.mxu0 0.0
    %713 = vmatprep.subr.mxu0 0.0
    %714 = vmatpush2.msra.mxu0 0.0
    %715 = vmatprep.subr.mxu0 0.0
    %716 = vmatpush2.msra.mxu0 0.0
    %717 = vmatprep.subr.mxu0 0.0
    %718 = vmatpush2.msra.mxu0 0.0
    %719 = vmatprep.subr.mxu0 0.0
    %720 = vmatpush2.msra.mxu0 0.0
    %721 = vmatprep.subr.mxu0 0.0
    %722 = vmatpush2.msra.mxu0 0.0
    %723 = vmatprep.subr.mxu0 0.0
    %724 = vmatpush2.msra.mxu0 0.0
    %725 = vmatprep.subr.mxu0 0.0
    %726 = vmatpush2.msra.mxu0 0.0
    %727 = vmatprep.subr.mxu0 0.0
    %728 = vmatpush2.msra.mxu0 0.0
    %729 = vmatprep.mubr.f32.mxu0 0.0
    %v730 = vand.u32 %v129, 4294901760
    %731 = vmatmul.mubr.f32.gmra.mxu0 %v730
    %v732 = vpop.f32.mrf.mxu0
    %v733 = vadd.f32 %v640, %v732
    %v734 = vpop.f32.mrf.mxu0
    %735 = vmatprep.mubr.f32.mxu0 0.0
    %v736 = vand.u32 %v132, 4294901760
    %737 = vmatmul.mubr.f32.gmra.mxu0 %v736
    %v738 = vpop.f32.mrf.mxu0
    %v739 = vadd.f32 %v646, %v738
    %v740 = vpop.f32.mrf.mxu0
    %741 = vmatprep.mubr.f32.mxu0 0.0
    %v742 = vand.u32 %v135, 4294901760
    %743 = vmatmul.mubr.f32.gmra.mxu0 %v742
    %v744 = vpop.f32.mrf.mxu0
    %v745 = vadd.f32 %v652, %v744
    %v746 = vpop.f32.mrf.mxu0
    %747 = vmatprep.mubr.f32.mxu0 0.0
    %v748 = vand.u32 %v138, 4294901760
    %749 = vmatmul.mubr.f32.gmra.mxu0 %v748
    %v750 = vpop.f32.mrf.mxu0
    %v751 = vadd.f32 %v658, %v750
    %v752 = vpop.f32.mrf.mxu0
    %753 = vdwg.mxu0
    %v754 = vtanh.pop %v733
    %v755 = vtanh.pop %v739
    %v756 = vtanh.pop %v745
    %v757 = vtanh.pop %v751
    %v758 = vld [vmem:[%s3] sm:$0x1]
    %s759 = sld [smem:[#allocation2]]
    %v760 = vstv %s759
    %v762 = vsel %vm127, %v758, 0
    %764 = vmatprep.subr.mxu0 0.0
    %765 = vmatpush1.msra.mxu0 0.0
    %766 = vmatprep.subr.mxu0 0.0
    %767 = vmatpush1.msra.mxu0 0.0
    %768 = vmatprep.subr.mxu0 0.0
    %769 = vmatpush1.msra.mxu0 0.0
    %770 = vmatprep.subr.mxu0 0.0
    %771 = vmatpush1.msra.mxu0 0.0
    %772 = vmatprep.subr.mxu0 0.0
    %773 = vmatpush1.msra.mxu0 0.0
    %774 = vmatprep.subr.mxu0 0.0
    %775 = vmatpush1.msra.mxu0 0.0
    %776 = vmatprep.subr.mxu0 0.0
    %777 = vmatpush1.msra.mxu0 0.0
    %778 = vmatprep.subr.mxu0 0.0
    %779 = vmatpush1.msra.mxu0 0.0
    %780 = vmatprep.subr.mxu0 0.0
    %781 = vmatpush1.msra.mxu0 0.0
    %782 = vmatprep.subr.mxu0 0.0
    %783 = vmatpush1.msra.mxu0 0.0
    %784 = vmatprep.subr.mxu0 0.0
    %785 = vmatpush1.msra.mxu0 0.0
    %786 = vmatprep.subr.mxu0 0.0
    %787 = vmatpush1.msra.mxu0 0.0
    %788 = vmatprep.subr.mxu0 0.0
    %v789 = vand.u32 %v757, 4294901760
    %790 = vmatpush1.msra.mxu0 %v789
    %791 = vmatprep.subr.mxu0 0.0
    %v792 = vand.u32 %v756, 4294901760
    %793 = vmatpush1.msra.mxu0 %v792
    %794 = vmatprep.subr.mxu0 0.0
    %v795 = vand.u32 %v755, 4294901760
    %796 = vmatpush1.msra.mxu0 %v795
    %797 = vmatprep.subr.mxu0 0.0
    %v798 = vand.u32 %v754, 4294901760
    %799 = vmatpush1.msra.mxu0 %v798
    %800 = vmatprep.subr.mxu0 0.0
    %801 = vmatpush2.msra.mxu0 0.0
    %802 = vmatprep.subr.mxu0 0.0
    %803 = vmatpush2.msra.mxu0 0.0
    %804 = vmatprep.subr.mxu0 0.0
    %805 = vmatpush2.msra.mxu0 0.0
    %806 = vmatprep.subr.mxu0 0.0
    %807 = vmatpush2.msra.mxu0 0.0
    %808 = vmatprep.subr.mxu0 0.0
    %809 = vmatpush2.msra.mxu0 0.0
    %810 = vmatprep.subr.mxu0 0.0
    %811 = vmatpush2.msra.mxu0 0.0
    %812 = vmatprep.subr.mxu0 0.0
    %813 = vmatpush2.msra.mxu0 0.0
    %814 = vmatprep.subr.mxu0 0.0
    %815 = vmatpush2.msra.mxu0 0.0
    %816 = vmatprep.subr.mxu0 0.0
    %817 = vmatpush2.msra.mxu0 0.0
    %818 = vmatprep.subr.mxu0 0.0
    %819 = vmatpush2.msra.mxu0 0.0
    %820 = vmatprep.subr.mxu0 0.0
    %821 = vmatpush2.msra.mxu0 0.0
    %822 = vmatprep.subr.mxu0 0.0
    %823 = vmatpush2.msra.mxu0 0.0
    %824 = vmatprep.subr.mxu0 0.0
    %825 = vmatpush2.msra.mxu0 0.0
    %826 = vmatprep.subr.mxu0 0.0
    %827 = vmatpush2.msra.mxu0 0.0
    %828 = vmatprep.subr.mxu0 0.0
    %829 = vmatpush2.msra.mxu0 0.0
    %830 = vmatprep.subr.mxu0 0.0
    %831 = vmatpush2.msra.mxu0 0.0
    %832 = vmatprep.mubr.f32.mxu0 0.0
    %v833 = vand.u32 %v762, 4294901760
    %v834 = vsub.f32 %v762, %v833
    %v835 = vand.u32 %v834, 4294901760
    %v836 = vsub.f32 %v834, %v835
    %v837 = vand.u32 %v836, 4294901760
    %838 = vmatmul.mubr.f32.gmra.mxu0 %v837
    %v839 = vpop.f32.mrf.mxu0
    %v840 = vadd.f32 %v760, %v839
    %v841 = vpop.f32.mrf.mxu0
    %842 = vdwg.mxu0
    %843 = vmatprep.subr.mxu0 0.0
    %844 = vmatpush1.msra.mxu0 0.0
    %845 = vmatprep.subr.mxu0 0.0
    %846 = vmatpush1.msra.mxu0 0.0
    %847 = vmatprep.subr.mxu0 0.0
    %848 = vmatpush1.msra.mxu0 0.0
    %849 = vmatprep.subr.mxu0 0.0
    %850 = vmatpush1.msra.mxu0 0.0
    %851 = vmatprep.subr.mxu0 0.0
    %852 = vmatpush1.msra.mxu0 0.0
    %853 = vmatprep.subr.mxu0 0.0
    %854 = vmatpush1.msra.mxu0 0.0
    %855 = vmatprep.subr.mxu0 0.0
    %856 = vmatpush1.msra.mxu0 0.0
    %857 = vmatprep.subr.mxu0 0.0
    %858 = vmatpush1.msra.mxu0 0.0
    %859 = vmatprep.subr.mxu0 0.0
    %860 = vmatpush1.msra.mxu0 0.0
    %861 = vmatprep.subr.mxu0 0.0
    %862 = vmatpush1.msra.mxu0 0.0
    %863 = vmatprep.subr.mxu0 0.0
    %864 = vmatpush1.msra.mxu0 0.0
    %865 = vmatprep.subr.mxu0 0.0
    %866 = vmatpush1.msra.mxu0 0.0
    %867 = vmatprep.subr.mxu0 0.0
    %v868 = vand.u32 %v757, 4294901760
    %v869 = vsub.f32 %v757, %v868
    %v870 = vand.u32 %v869, 4294901760
    %v871 = vsub.f32 %v869, %v870
    %v872 = vand.u32 %v871, 4294901760
    %873 = vmatpush1.msra.mxu0 %v872
    %874 = vmatprep.subr.mxu0 0.0
    %v875 = vand.u32 %v756, 4294901760
    %v876 = vsub.f32 %v756, %v875
    %v877 = vand.u32 %v876, 4294901760
    %v878 = vsub.f32 %v876, %v877
    %v879 = vand.u32 %v878, 4294901760
    %880 = vmatpush1.msra.mxu0 %v879
    %881 = vmatprep.subr.mxu0 0.0
    %v882 = vand.u32 %v755, 4294901760
    %v883 = vsub.f32 %v755, %v882
    %v884 = vand.u32 %v883, 4294901760
    %v885 = vsub.f32 %v883, %v884
    %v886 = vand.u32 %v885, 4294901760
    %887 = vmatpush1.msra.mxu0 %v886
    %888 = vmatprep.subr.mxu0 0.0
    %v889 = vand.u32 %v754, 4294901760
    %v890 = vsub.f32 %v754, %v889
    %v891 = vand.u32 %v890, 4294901760
    %v892 = vsub.f32 %v890, %v891
    %v893 = vand.u32 %v892, 4294901760
    %894 = vmatpush1.msra.mxu0 %v893
    %895 = vmatprep.subr.mxu0 0.0
    %896 = vmatpush2.msra.mxu0 0.0
    %897 = vmatprep.subr.mxu0 0.0
    %898 = vmatpush2.msra.mxu0 0.0
    %899 = vmatprep.subr.mxu0 0.0
    %900 = vmatpush2.msra.mxu0 0.0
    %901 = vmatprep.subr.mxu0 0.0
    %902 = vmatpush2.msra.mxu0 0.0
    %903 = vmatprep.subr.mxu0 0.0
    %904 = vmatpush2.msra.mxu0 0.0
    %905 = vmatprep.subr.mxu0 0.0
    %906 = vmatpush2.msra.mxu0 0.0
    %907 = vmatprep.subr.mxu0 0.0
    %908 = vmatpush2.msra.mxu0 0.0
    %909 = vmatprep.subr.mxu0 0.0
    %910 = vmatpush2.msra.mxu0 0.0
    %911 = vmatprep.subr.mxu0 0.0
    %912 = vmatpush2.msra.mxu0 0.0
    %913 = vmatprep.subr.mxu0 0.0
    %914 = vmatpush2.msra.mxu0 0.0
    %915 = vmatprep.subr.mxu0 0.0
    %916 = vmatpush2.msra.mxu0 0.0
    %917 = vmatprep.subr.mxu0 0.0
    %918 = vmatpush2.msra.mxu0 0.0
    %919 = vmatprep.subr.mxu0 0.0
    %920 = vmatpush2.msra.mxu0 0.0
    %921 = vmatprep.subr.mxu0 0.0
    %922 = vmatpush2.msra.mxu0 0.0
    %923 = vmatprep.subr.mxu0 0.0
    %924 = vmatpush2.msra.mxu0 0.0
    %925 = vmatprep.subr.mxu0 0.0
    %926 = vmatpush2.msra.mxu0 0.0
    %927 = vmatprep.mubr.f32.mxu0 0.0
    %v928 = vand.u32 %v762, 4294901760
    %929 = vmatmul.mubr.f32.gmra.mxu0 %v928
    %v930 = vpop.f32.mrf.mxu0
    %v931 = vadd.f32 %v840, %v930
    %v932 = vpop.f32.mrf.mxu0
    %933 = vdwg.mxu0
    %934 = vmatprep.subr.mxu0 0.0
    %935 = vmatpush1.msra.mxu0 0.0
    %936 = vmatprep.subr.mxu0 0.0
    %937 = vmatpush1.msra.mxu0 0.0
    %938 = vmatprep.subr.mxu0 0.0
    %939 = vmatpush1.msra.mxu0 0.0
    %940 = vmatprep.subr.mxu0 0.0
    %941 = vmatpush1.msra.mxu0 0.0
    %942 = vmatprep.subr.mxu0 0.0
    %943 = vmatpush1.msra.mxu0 0.0
    %944 = vmatprep.subr.mxu0 0.0
    %945 = vmatpush1.msra.mxu0 0.0
    %946 = vmatprep.subr.mxu0 0.0
    %947 = vmatpush1.msra.mxu0 0.0
    %948 = vmatprep.subr.mxu0 0.0
    %949 = vmatpush1.msra.mxu0 0.0
    %950 = vmatprep.subr.mxu0 0.0
    %951 = vmatpush1.msra.mxu0 0.0
    %952 = vmatprep.subr.mxu0 0.0
    %953 = vmatpush1.msra.mxu0 0.0
    %954 = vmatprep.subr.mxu0 0.0
    %955 = vmatpush1.msra.mxu0 0.0
    %956 = vmatprep.subr.mxu0 0.0
    %957 = vmatpush1.msra.mxu0 0.0
    %958 = vmatprep.subr.mxu0 0.0
    %v959 = vand.u32 %v757, 4294901760
    %v960 = vsub.f32 %v757, %v959
    %961 = vmatpush1.msra.mxu0 %v960
    %962 = vmatprep.subr.mxu0 0.0
    %v963 = vand.u32 %v756, 4294901760
    %v964 = vsub.f32 %v756, %v963
    %965 = vmatpush1.msra.mxu0 %v964
    %966 = vmatprep.subr.mxu0 0.0
    %v967 = vand.u32 %v755, 4294901760
    %v968 = vsub.f32 %v755, %v967
    %969 = vmatpush1.msra.mxu0 %v968
    %970 = vmatprep.subr.mxu0 0.0
    %v971 = vand.u32 %v754, 4294901760
    %v972 = vsub.f32 %v754, %v971
    %973 = vmatpush1.msra.mxu0 %v972
    %974 = vmatprep.subr.mxu0 0.0
    %975 = vmatpush2.msra.mxu0 0.0
    %976 = vmatprep.subr.mxu0 0.0
    %977 = vmatpush2.msra.mxu0 0.0
    %978 = vmatprep.subr.mxu0 0.0
    %979 = vmatpush2.msra.mxu0 0.0
    %980 = vmatprep.subr.mxu0 0.0
    %981 = vmatpush2.msra.mxu0 0.0
    %982 = vmatprep.subr.mxu0 0.0
    %983 = vmatpush2.msra.mxu0 0.0
    %984 = vmatprep.subr.mxu0 0.0
    %985 = vmatpush2.msra.mxu0 0.0
    %986 = vmatprep.subr.mxu0 0.0
    %987 = vmatpush2.msra.mxu0 0.0
    %988 = vmatprep.subr.mxu0 0.0
    %989 = vmatpush2.msra.mxu0 0.0
    %990 = vmatprep.subr.mxu0 0.0
    %991 = vmatpush2.msra.mxu0 0.0
    %992 = vmatprep.subr.mxu0 0.0
    %993 = vmatpush2.msra.mxu0 0.0
    %994 = vmatprep.subr.mxu0 0.0
    %995 = vmatpush2.msra.mxu0 0.0
    %996 = vmatprep.subr.mxu0 0.0
    %997 = vmatpush2.msra.mxu0 0.0
    %998 = vmatprep.subr.mxu0 0.0
    %999 = vmatpush2.msra.mxu0 0.0
    %1000 = vmatprep.subr.mxu0 0.0
    %1001 = vmatpush2.msra.mxu0 0.0
    %1002 = vmatprep.subr.mxu0 0.0
    %1003 = vmatpush2.msra.mxu0 0.0
    %1004 = vmatprep.subr.mxu0 0.0
    %1005 = vmatpush2.msra.mxu0 0.0
    %1006 = vmatprep.mubr.f32.mxu0 0.0
    %v1007 = vand.u32 %v762, 4294901760
    %v1008 = vsub.f32 %v762, %v1007
    %1009 = vmatmul.mubr.f32.gmra.mxu0 %v1008
    %v1010 = vpop.f32.mrf.mxu0
    %v1011 = vadd.f32 %v931, %v1010
    %v1012 = vpop.f32.mrf.mxu0
    %1013 = vdwg.mxu0
    %1014 = vmatprep.subr.mxu0 0.0
    %1015 = vmatpush1.msra.mxu0 0.0
    %1016 = vmatprep.subr.mxu0 0.0
    %1017 = vmatpush1.msra.mxu0 0.0
    %1018 = vmatprep.subr.mxu0 0.0
    %1019 = vmatpush1.msra.mxu0 0.0
    %1020 = vmatprep.subr.mxu0 0.0
    %1021 = vmatpush1.msra.mxu0 0.0
    %1022 = vmatprep.subr.mxu0 0.0
    %1023 = vmatpush1.msra.mxu0 0.0
    %1024 = vmatprep.subr.mxu0 0.0
    %1025 = vmatpush1.msra.mxu0 0.0
    %1026 = vmatprep.subr.mxu0 0.0
    %1027 = vmatpush1.msra.mxu0 0.0
    %1028 = vmatprep.subr.mxu0 0.0
    %1029 = vmatpush1.msra.mxu0 0.0
    %1030 = vmatprep.subr.mxu0 0.0
    %1031 = vmatpush1.msra.mxu0 0.0
    %1032 = vmatprep.subr.mxu0 0.0
    %1033 = vmatpush1.msra.mxu0 0.0
    %1034 = vmatprep.subr.mxu0 0.0
    %1035 = vmatpush1.msra.mxu0 0.0
    %1036 = vmatprep.subr.mxu0 0.0
    %1037 = vmatpush1.msra.mxu0 0.0
    %1038 = vmatprep.subr.mxu0 0.0
    %v1039 = vand.u32 %v757, 4294901760
    %1040 = vmatpush1.msra.mxu0 %v1039
    %1041 = vmatprep.subr.mxu0 0.0
    %v1042 = vand.u32 %v756, 4294901760
    %1043 = vmatpush1.msra.mxu0 %v1042
    %1044 = vmatprep.subr.mxu0 0.0
    %v1045 = vand.u32 %v755, 4294901760
    %1046 = vmatpush1.msra.mxu0 %v1045
    %1047 = vmatprep.subr.mxu0 0.0
    %v1048 = vand.u32 %v754, 4294901760
    %1049 = vmatpush1.msra.mxu0 %v1048
    %1050 = vmatprep.subr.mxu0 0.0
    %1051 = vmatpush2.msra.mxu0 0.0
    %1052 = vmatprep.subr.mxu0 0.0
    %1053 = vmatpush2.msra.mxu0 0.0
    %1054 = vmatprep.subr.mxu0 0.0
    %1055 = vmatpush2.msra.mxu0 0.0
    %1056 = vmatprep.subr.mxu0 0.0
    %1057 = vmatpush2.msra.mxu0 0.0
    %1058 = vmatprep.subr.mxu0 0.0
    %1059 = vmatpush2.msra.mxu0 0.0
    %1060 = vmatprep.subr.mxu0 0.0
    %1061 = vmatpush2.msra.mxu0 0.0
    %1062 = vmatprep.subr.mxu0 0.0
    %1063 = vmatpush2.msra.mxu0 0.0
    %1064 = vmatprep.subr.mxu0 0.0
    %1065 = vmatpush2.msra.mxu0 0.0
    %1066 = vmatprep.subr.mxu0 0.0
    %1067 = vmatpush2.msra.mxu0 0.0
    %1068 = vmatprep.subr.mxu0 0.0
    %1069 = vmatpush2.msra.mxu0 0.0
    %1070 = vmatprep.subr.mxu0 0.0
    %1071 = vmatpush2.msra.mxu0 0.0
    %1072 = vmatprep.subr.mxu0 0.0
    %1073 = vmatpush2.msra.mxu0 0.0
    %1074 = vmatprep.subr.mxu0 0.0
    %1075 = vmatpush2.msra.mxu0 0.0
    %1076 = vmatprep.subr.mxu0 0.0
    %1077 = vmatpush2.msra.mxu0 0.0
    %1078 = vmatprep.subr.mxu0 0.0
    %1079 = vmatpush2.msra.mxu0 0.0
    %1080 = vmatprep.subr.mxu0 0.0
    %1081 = vmatpush2.msra.mxu0 0.0
    %1082 = vmatprep.mubr.f32.mxu0 0.0
    %v1083 = vand.u32 %v762, 4294901760
    %v1084 = vsub.f32 %v762, %v1083
    %v1085 = vand.u32 %v1084, 4294901760
    %1086 = vmatmul.mubr.f32.gmra.mxu0 %v1085
    %v1087 = vpop.f32.mrf.mxu0
    %v1088 = vadd.f32 %v1011, %v1087
    %v1089 = vpop.f32.mrf.mxu0
    %1090 = vdwg.mxu0
    %1091 = vmatprep.subr.mxu0 0.0
    %1092 = vmatpush1.msra.mxu0 0.0
    %1093 = vmatprep.subr.mxu0 0.0
    %1094 = vmatpush1.msra.mxu0 0.0
    %1095 = vmatprep.subr.mxu0 0.0
    %1096 = vmatpush1.msra.mxu0 0.0
    %1097 = vmatprep.subr.mxu0 0.0
    %1098 = vmatpush1.msra.mxu0 0.0
    %1099 = vmatprep.subr.mxu0 0.0
    %1100 = vmatpush1.msra.mxu0 0.0
    %1101 = vmatprep.subr.mxu0 0.0
    %1102 = vmatpush1.msra.mxu0 0.0
    %1103 = vmatprep.subr.mxu0 0.0
    %1104 = vmatpush1.msra.mxu0 0.0
    %1105 = vmatprep.subr.mxu0 0.0
    %1106 = vmatpush1.msra.mxu0 0.0
    %1107 = vmatprep.subr.mxu0 0.0
    %1108 = vmatpush1.msra.mxu0 0.0
    %1109 = vmatprep.subr.mxu0 0.0
    %1110 = vmatpush1.msra.mxu0 0.0
    %1111 = vmatprep.subr.mxu0 0.0
    %1112 = vmatpush1.msra.mxu0 0.0
    %1113 = vmatprep.subr.mxu0 0.0
    %1114 = vmatpush1.msra.mxu0 0.0
    %1115 = vmatprep.subr.mxu0 0.0
    %v1116 = vand.u32 %v757, 4294901760
    %v1117 = vsub.f32 %v757, %v1116
    %v1118 = vand.u32 %v1117, 4294901760
    %1119 = vmatpush1.msra.mxu0 %v1118
    %1120 = vmatprep.subr.mxu0 0.0
    %v1121 = vand.u32 %v756, 4294901760
    %v1122 = vsub.f32 %v756, %v1121
    %v1123 = vand.u32 %v1122, 4294901760
    %1124 = vmatpush1.msra.mxu0 %v1123
    %1125 = vmatprep.subr.mxu0 0.0
    %v1126 = vand.u32 %v755, 4294901760
    %v1127 = vsub.f32 %v755, %v1126
    %v1128 = vand.u32 %v1127, 4294901760
    %1129 = vmatpush1.msra.mxu0 %v1128
    %1130 = vmatprep.subr.mxu0 0.0
    %v1131 = vand.u32 %v754, 4294901760
    %v1132 = vsub.f32 %v754, %v1131
    %v1133 = vand.u32 %v1132, 4294901760
    %1134 = vmatpush1.msra.mxu0 %v1133
    %1135 = vmatprep.subr.mxu0 0.0
    %1136 = vmatpush2.msra.mxu0 0.0
    %1137 = vmatprep.subr.mxu0 0.0
    %1138 = vmatpush2.msra.mxu0 0.0
    %1139 = vmatprep.subr.mxu0 0.0
    %1140 = vmatpush2.msra.mxu0 0.0
    %1141 = vmatprep.subr.mxu0 0.0
    %1142 = vmatpush2.msra.mxu0 0.0
    %1143 = vmatprep.subr.mxu0 0.0
    %1144 = vmatpush2.msra.mxu0 0.0
    %1145 = vmatprep.subr.mxu0 0.0
    %1146 = vmatpush2.msra.mxu0 0.0
    %1147 = vmatprep.subr.mxu0 0.0
    %1148 = vmatpush2.msra.mxu0 0.0
    %1149 = vmatprep.subr.mxu0 0.0
    %1150 = vmatpush2.msra.mxu0 0.0
    %1151 = vmatprep.subr.mxu0 0.0
    %1152 = vmatpush2.msra.mxu0 0.0
    %1153 = vmatprep.subr.mxu0 0.0
    %1154 = vmatpush2.msra.mxu0 0.0
    %1155 = vmatprep.subr.mxu0 0.0
    %1156 = vmatpush2.msra.mxu0 0.0
    %1157 = vmatprep.subr.mxu0 0.0
    %1158 = vmatpush2.msra.mxu0 0.0
    %1159 = vmatprep.subr.mxu0 0.0
    %1160 = vmatpush2.msra.mxu0 0.0
    %1161 = vmatprep.subr.mxu0 0.0
    %1162 = vmatpush2.msra.mxu0 0.0
    %1163 = vmatprep.subr.mxu0 0.0
    %1164 = vmatpush2.msra.mxu0 0.0
    %1165 = vmatprep.subr.mxu0 0.0
    %1166 = vmatpush2.msra.mxu0 0.0
    %1167 = vmatprep.mubr.f32.mxu0 0.0
    %v1168 = vand.u32 %v762, 4294901760
    %1169 = vmatmul.mubr.f32.gmra.mxu0 %v1168
    %v1170 = vpop.f32.mrf.mxu0
    %v1171 = vadd.f32 %v1088, %v1170
    %v1172 = vpop.f32.mrf.mxu0
    %1173 = vdwg.mxu0
    %1174 = vmatprep.subr.mxu0 0.0
    %1175 = vmatpush1.msra.mxu0 0.0
    %1176 = vmatprep.subr.mxu0 0.0
    %1177 = vmatpush1.msra.mxu0 0.0
    %1178 = vmatprep.subr.mxu0 0.0
    %1179 = vmatpush1.msra.mxu0 0.0
    %1180 = vmatprep.subr.mxu0 0.0
    %1181 = vmatpush1.msra.mxu0 0.0
    %1182 = vmatprep.subr.mxu0 0.0
    %1183 = vmatpush1.msra.mxu0 0.0
    %1184 = vmatprep.subr.mxu0 0.0
    %1185 = vmatpush1.msra.mxu0 0.0
    %1186 = vmatprep.subr.mxu0 0.0
    %1187 = vmatpush1.msra.mxu0 0.0
    %1188 = vmatprep.subr.mxu0 0.0
    %1189 = vmatpush1.msra.mxu0 0.0
    %1190 = vmatprep.subr.mxu0 0.0
    %1191 = vmatpush1.msra.mxu0 0.0
    %1192 = vmatprep.subr.mxu0 0.0
    %1193 = vmatpush1.msra.mxu0 0.0
    %1194 = vmatprep.subr.mxu0 0.0
    %1195 = vmatpush1.msra.mxu0 0.0
    %1196 = vmatprep.subr.mxu0 0.0
    %1197 = vmatpush1.msra.mxu0 0.0
    %1198 = vmatprep.subr.mxu0 0.0
    %v1199 = vand.u32 %v757, 4294901760
    %1200 = vmatpush1.msra.mxu0 %v1199
    %1201 = vmatprep.subr.mxu0 0.0
    %v1202 = vand.u32 %v756, 4294901760
    %1203 = vmatpush1.msra.mxu0 %v1202
    %1204 = vmatprep.subr.mxu0 0.0
    %v1205 = vand.u32 %v755, 4294901760
    %1206 = vmatpush1.msra.mxu0 %v1205
    %1207 = vmatprep.subr.mxu0 0.0
    %v1208 = vand.u32 %v754, 4294901760
    %1209 = vmatpush1.msra.mxu0 %v1208
    %1210 = vmatprep.subr.mxu0 0.0
    %1211 = vmatpush2.msra.mxu0 0.0
    %1212 = vmatprep.subr.mxu0 0.0
    %1213 = vmatpush2.msra.mxu0 0.0
    %1214 = vmatprep.subr.mxu0 0.0
    %1215 = vmatpush2.msra.mxu0 0.0
    %1216 = vmatprep.subr.mxu0 0.0
    %1217 = vmatpush2.msra.mxu0 0.0
    %1218 = vmatprep.subr.mxu0 0.0
    %1219 = vmatpush2.msra.mxu0 0.0
    %1220 = vmatprep.subr.mxu0 0.0
    %1221 = vmatpush2.msra.mxu0 0.0
    %1222 = vmatprep.subr.mxu0 0.0
    %1223 = vmatpush2.msra.mxu0 0.0
    %1224 = vmatprep.subr.mxu0 0.0
    %1225 = vmatpush2.msra.mxu0 0.0
    %1226 = vmatprep.subr.mxu0 0.0
    %1227 = vmatpush2.msra.mxu0 0.0
    %1228 = vmatprep.subr.mxu0 0.0
    %1229 = vmatpush2.msra.mxu0 0.0
    %1230 = vmatprep.subr.mxu0 0.0
    %1231 = vmatpush2.msra.mxu0 0.0
    %1232 = vmatprep.subr.mxu0 0.0
    %1233 = vmatpush2.msra.mxu0 0.0
    %1234 = vmatprep.subr.mxu0 0.0
    %1235 = vmatpush2.msra.mxu0 0.0
    %1236 = vmatprep.subr.mxu0 0.0
    %1237 = vmatpush2.msra.mxu0 0.0
    %1238 = vmatprep.subr.mxu0 0.0
    %1239 = vmatpush2.msra.mxu0 0.0
    %1240 = vmatprep.subr.mxu0 0.0
    %1241 = vmatpush2.msra.mxu0 0.0
    %1242 = vmatprep.mubr.f32.mxu0 0.0
    %v1243 = vand.u32 %v762, 4294901760
    %1244 = vmatmul.mubr.f32.gmra.mxu0 %v1243
    %v1245 = vpop.f32.mrf.mxu0
    %v1246 = vadd.f32 %v1171, %v1245
    %v1247 = vpop.f32.mrf.mxu0
    %1248 = vdwg.mxu0
    %1249 = vst [vmem:[#allocation3] sm:$0x1] %v1246
    // Predicated region
    $region22: #{tpu_custom_call.1} parent=1 // pred_check
      _
    $region23: #{tpu_custom_call.1} parent=1 // pred_check_branch
      %1251 = sbr.rel (0) target = $region25
    $region24: #{tpu_custom_call.1} parent=1 // pred_region
      %s1253 = ssub.s32 16, 16
      %1254 = vsyncadd [#allocation4], %s1253
      %s1256 = sshll.u32 [#allocation3], 4
      %s1257 = int_to_ptr.vmem [resolvable:$true] %s1256
      %1259 = dma.vmem_to_hbm [thread:$0]  %s1257, 16, %s5, [#allocation4]
    $region25: #{tpu_custom_call.1} parent=1 // pred_fallthru
      _
    // Predicated region
    $region26: #{tpu_custom_call.1} parent=1 // pred_check
      _
    $region27: #{tpu_custom_call.1} parent=1 // pred_check_branch
      %1261 = sbr.rel (0) target = $region29
    $region28: #{tpu_custom_call.1} parent=1 // pred_region
      %1262 = dma.done [#allocation4], 16
    $region29: #{tpu_custom_call.1} parent=1 // pred_fallthru
      _
    %1263 = vsyncpa [#allocation4], 1

</llo_original>
